<compile_context>
chip_gen: v6e
topology: v6e:2x2x1
jax: 0.10.0
libtpu: 0.0.40
codegen_flags: <defaults>
</compile_context>

<pallas_src>
import functools

import jax
import jax.numpy as jnp
from jax.experimental import pallas as pl
from jax.experimental.pallas import tpu as pltpu

_BN_EPS = 1e-5


def _glo_avg_conv_kernel(x_ref, w_ref, max_ref, sum_ref, sq_ref,
                         maxacc, sumacc, sqacc, *,
                         tb, tile_s, s_total, needs_mask):
    # x_ref  : (Tb, C_in, tile_s)   batch-group / sample tile of x (native layout)
    # w_ref  : (C_out, C_in)        full weight, resident in VMEM
    # max_ref: (1, C_out, Tb)       raw per-batch conv max for this batch group
    # sum_ref/sq_ref: (1, C_out, 1) per-group partial sum / sum-of-squares (f32)
    # maxacc : (C_out, Tb) f32      running per-batch max (this group only)
    # sumacc/sqacc: (C_out, 1) f32  running per-group stats
    s = pl.program_id(1)
    ns = pl.num_programs(1)
    c_out = w_ref.shape[0]

    @pl.when(s == 0)
    def _init():
        maxacc[...] = jnp.full(maxacc.shape, -jnp.inf, dtype=maxacc.dtype)
        sumacc[...] = jnp.zeros_like(sumacc)
        sqacc[...] = jnp.zeros_like(sqacc)

    if needs_mask:
        # Valid sample count for this tile (>= tile_s on all but the last tile).
        valid = s_total - s * tile_s
        lane = jax.lax.broadcasted_iota(jnp.int32, (c_out, tile_s), 1)
        mask = lane < valid
    else:
        mask = None

    w = w_ref[...]
    psum = jnp.zeros((c_out, 1), jnp.float32)
    psq = jnp.zeros((c_out, 1), jnp.float32)

    for bi in range(tb):  # static unroll over the small batch tile
        # 1x1 conv in native layout: (C_out, C_in) @ (C_in, tile_s); lanes = samples.
        y = jnp.dot(w, x_ref[bi], preferred_element_type=jnp.float32)
        if needs_mask:
            ys = jnp.where(mask, y, 0.0)
            ym = jnp.where(mask, y, -jnp.inf)
        else:
            ys = ym = y
        # Per-channel streaming BN stats (lane-axis reductions, f32 accumulation).
        psum = psum + jnp.sum(ys, axis=1, keepdims=True)
        psq = psq + jnp.sum(ys * ys, axis=1, keepdims=True)
        # Column-scoped running max of the RAW conv output for this batch only.
        pm = jnp.max(ym, axis=1, keepdims=True)                     # (C_out, 1)
        maxacc[:, bi:bi + 1] = jnp.maximum(maxacc[:, bi:bi + 1], pm)

    sumacc[...] += psum
    sqacc[...] += psq

    @pl.when(s == ns - 1)
    def _commit():
        # Tiny, once-per-batch-group stores; BN affine + ReLU happen in the epilogue.
        max_ref[0] = maxacc[...]
        sum_ref[0] = sumacc[...]
        sq_ref[0] = sqacc[...]


def _largest_divisor_leq(n, cap):
    for d in range(min(n, cap), 0, -1):
        if n % d == 0:
            return d
    return 1


def _pick_tiles(B, S, C_in, C_out, in_bytes, *, tile_s_cap, tb_cap, vmem_budget):
    """Batch tile (divisor of B) and sample tile (full S, or a multiple of 128)."""
    tb = _largest_divisor_leq(B, max(1, tb_cap))
    tile_s = S if S <= tile_s_cap else max(128, (tile_s_cap // 128) * 128)

    def step_bytes(tb_, ts_):
        return (3 * tb_ * C_in * ts_ * in_bytes     # x block (multi-buffered)
                + 2 * C_out * C_in * in_bytes       # weight (double-buffered)
                + 4 * C_out * ts_ * 4               # f32 conv tile + temporaries
                + 8 * C_out * (tb_ + 2) * 4)        # accumulators + output blocks

    for _ in range(64):  # bounded refinement
        if step_bytes(tb, tile_s) <= vmem_budget:
            break
        if tile_s > 256:
            tile_s = max(128, ((tile_s // 2) // 128) * 128)  # masking covers the tail
        elif tb > 1:
            tb = _largest_divisor_leq(B, tb - 1)
        else:
            break
    return tb, tile_s


def glo_avg_conv(x_nchw, weight, bias=None, *,
                 compute_dtype=jnp.float32, tile_s_cap=2048, tb_cap=8):
    """x_nchw: (B, C_in, 1, nsample); weight: (C_out, C_in) (1x1 conv, squeezed).
    bias is ignored: a per-channel constant cancels exactly under train-mode BatchNorm.
    Returns (B, C_out, 1), matching the PyTorch module output (B, C_out, npoint=1)."""
    del bias  # cancelled by BN mean subtraction (fresh BN: gamma=1, beta=0)

    B, C_in, H, S = x_nchw.shape
    assert H == 1
    C_out = weight.shape[0]

    x3 = x_nchw[:, :, 0, :].astype(compute_dtype)           # (B, C_in, S) — squeeze only
    w2 = weight.reshape(C_out, C_in).astype(compute_dtype)

    in_bytes = jnp.dtype(compute_dtype).itemsize
    tb, tile_s = _pick_tiles(B, S, C_in, C_out, in_bytes,
                             tile_s_cap=tile_s_cap, tb_cap=tb_cap,
                             vmem_budget=20 * 1024 * 1024)
    nb = B // tb
    ns = pl.cdiv(S, tile_s)
    needs_mask = (S % tile_s) != 0

    kernel = functools.partial(_glo_avg_conv_kernel, tb=tb, tile_s=tile_s,
                               s_total=S, needs_mask=needs_mask)

    out_max, out_sum, out_sq = pl.pallas_call(
        kernel,
        out_shape=(
            jax.ShapeDtypeStruct((nb, C_out, tb), jnp.float32),  # raw per-batch max
            jax.ShapeDtypeStruct((nb, C_out, 1), jnp.float32),   # per-group sum
            jax.ShapeDtypeStruct((nb, C_out, 1), jnp.float32),   # per-group sum sq
        ),
        grid_spec=pltpu.PrefetchScalarGridSpec(
            num_scalar_prefetch=0,
            grid=(nb, ns),
            in_specs=[
                pl.BlockSpec((tb, C_in, tile_s), lambda b, s: (b, 0, s)),
                pl.BlockSpec((C_out, C_in), lambda b, s: (0, 0)),
            ],
            out_specs=(
                pl.BlockSpec((1, C_out, tb), lambda b, s: (b, 0, 0)),
                pl.BlockSpec((1, C_out, 1), lambda b, s: (b, 0, 0)),
                pl.BlockSpec((1, C_out, 1), lambda b, s: (b, 0, 0)),
            ),
            scratch_shapes=[
                pltpu.VMEM((C_out, tb), jnp.float32),  # running per-batch max
                pltpu.VMEM((C_out, 1), jnp.float32),   # running sum
                pltpu.VMEM((C_out, 1), jnp.float32),   # running sum of squares
            ],
        ),
        compiler_params=pltpu.CompilerParams(
            # Per-group scratch + per-group output blocks: batch-group axis is parallel
            # (lets v7x's two TensorCores split it); sample axis carries accumulators
            # and revisits the output block, so it stays arbitrary.
            dimension_semantics=("parallel", "arbitrary"),
            vmem_limit_bytes=48 * 1024 * 1024,
        ),
    )(x3, w2)

    # Tiny XLA epilogue: train-mode BN statistics over all B*S conv outputs, then the
    # monotone BN affine + ReLU applied only to the per-batch maxima.
    n_total = float(B * S)
    mean = jnp.sum(out_sum[:, :, 0], axis=0) / n_total                 # (C_out,)
    ex2 = jnp.sum(out_sq[:, :, 0], axis=0) / n_total
    # Single-pass variance (clamped). Fine for conv activations with modest offsets;
    # a two-pass fallback could be added if per-channel means were huge vs. std.
    var = jnp.maximum(ex2 - mean * mean, 0.0)
    inv_std = jax.lax.rsqrt(var + _BN_EPS)

    maxes = jnp.transpose(out_max, (0, 2, 1)).reshape(B, C_out)        # (B, C_out)
    out = jnp.maximum((maxes - mean[None, :]) * inv_std[None, :], 0.0)
    return out[:, :, None]                                             # (B, C_out, 1)


def _reference(x_nchw, weight, bias):
    """Pure-JAX reference of the PyTorch forward (train-mode BN, fresh params)."""
    y = jnp.einsum("bcis,oc->bois", x_nchw, weight) + bias[None, :, None, None]
    mean = jnp.mean(y, axis=(0, 2, 3), keepdims=True)
    var = jnp.mean((y - mean) ** 2, axis=(0, 2, 3), keepdims=True)
    z = (y - mean) / jnp.sqrt(var + _BN_EPS)
    r = jnp.maximum(z, 0.0)
    return jnp.max(r, axis=3)                                          # (B, C_out, 1)


if __name__ == "__main__":
    B, C_in, C_out, nsample = 2, 4, 32, 16

    key = jax.random.PRNGKey(0)
    kx, kw, kb = jax.random.split(key, 3)

    # Input in the module's documented layout: (B, C_in, 1, nsample)
    x = jax.random.normal(kx, (B, C_in, 1, nsample), dtype=jnp.float32)
    # kaiming_normal_ on Conv2d weight (C_out, C_in, 1, 1): std = sqrt(2 / C_in)
    w = jax.random.normal(kw, (C_out, C_in), dtype=jnp.float32) * jnp.sqrt(2.0 / C_in)
    # Module inits bias to 0; use a nonzero bias to exercise the exact cancellation
    # of a per-channel constant under train-mode BatchNorm.
    b = 0.1 * jax.random.normal(kb, (C_out,), dtype=jnp.float32)

    ref = _reference(x, w, b)

    # f32 path: exact parity with the PyTorch forward math.
    out = glo_avg_conv(x, w, b, compute_dtype=jnp.float32)
    jax.block_until_ready(out)
    assert out.shape == (B, C_out, 1)
    assert bool(jnp.allclose(out, ref, rtol=2e-4, atol=2e-4)), "f32 mismatch vs reference"

    # bf16 input path (recommended on v6e/v7x: halves the dominant x HBM stream,
    # f32 accumulation throughout) — looser tolerance vs. the f32 reference.
    out_bf16 = glo_avg_conv(x, w, b, compute_dtype=jnp.bfloat16)
    jax.block_until_ready(out_bf16)
    assert out_bf16.shape == (B, C_out, 1)
    assert bool(jnp.allclose(out_bf16, ref, rtol=1e-1, atol=1e-1)), "bf16 mismatch vs reference"

    print("KERNEL_OK")
</pallas_src>

<mosaic_0001>
module attributes {stable_mosaic.version = 11 : i64} {
  func.func @_glo_avg_conv_kernel(%arg0: i32, %arg1: i32, %arg2: memref<2x4x16xf32, #tpu.memory_space<vmem>>, %arg3: memref<32x4xf32, #tpu.memory_space<vmem>>, %arg4: memref<1x32x2xf32, #tpu.memory_space<vmem>>, %arg5: memref<1x32x1xf32, #tpu.memory_space<vmem>>, %arg6: memref<1x32x1xf32, #tpu.memory_space<vmem>>, %arg7: memref<32x2xf32, #tpu.memory_space<vmem>>, %arg8: memref<32x1xf32, #tpu.memory_space<vmem>>, %arg9: memref<32x1xf32, #tpu.memory_space<vmem>>) attributes {dimension_semantics = [#tpu.dimension_semantics<parallel>, #tpu.dimension_semantics<arbitrary>], iteration_bounds = array<i64: 1, 1>, scalar_prefetch = 0 : i64, scratch_operands = 3 : i64, tpu.core_type = #tpu.core_type<tc>, window_params = [{transform_indices = @transform_0, window_bounds = array<i64: 2, 4, 16>}, {pipeline_mode = #tpu.pipeline_mode<synchronous>, transform_indices = @transform_1, window_bounds = array<i64: 32, 4>}, {transform_indices = @transform_2, window_bounds = array<i64: 1, 32, 2>}, {transform_indices = @transform_3, window_bounds = array<i64: 1, 32, 1>}, {transform_indices = @transform_4, window_bounds = array<i64: 1, 32, 1>}]} {
    %c0_i32 = arith.constant 0 : i32
    %0 = arith.cmpi eq, %arg1, %c0_i32 : i32
    %1 = arith.extui %0 : i1 to i32
    %c0_i32_0 = arith.constant 0 : i32
    %2 = arith.cmpi ne, %1, %c0_i32_0 : i32
    scf.if %2 {
      %cst_34 = arith.constant 0xFF800000 : f32
      %45 = vector.broadcast %cst_34 : f32 to vector<32x2xf32>
      %c0_35 = arith.constant 0 : index
      %c0_36 = arith.constant 0 : index
      %46 = vector.load %arg7[%c0_35, %c0_36] : memref<32x2xf32, #tpu.memory_space<vmem>>, vector<32x2xf32>
      tpu.vector_store %arg7[%c0_35, %c0_36], %45 {strides = array<i32>} : memref<32x2xf32, #tpu.memory_space<vmem>>, vector<32x2xf32>,
      %cst_37 = arith.constant 0.000000e+00 : f32
      %47 = vector.broadcast %cst_37 : f32 to vector<32x1xf32>
      %c0_38 = arith.constant 0 : index
      %c0_39 = arith.constant 0 : index
      %48 = vector.load %arg8[%c0_38, %c0_39] : memref<32x1xf32, #tpu.memory_space<vmem>>, vector<32x1xf32>
      tpu.vector_store %arg8[%c0_38, %c0_39], %47 {strides = array<i32>} : memref<32x1xf32, #tpu.memory_space<vmem>>, vector<32x1xf32>,
      %cst_40 = arith.constant 0.000000e+00 : f32
      %49 = vector.broadcast %cst_40 : f32 to vector<32x1xf32>
      %c0_41 = arith.constant 0 : index
      %c0_42 = arith.constant 0 : index
      %50 = vector.load %arg9[%c0_41, %c0_42] : memref<32x1xf32, #tpu.memory_space<vmem>>, vector<32x1xf32>
      tpu.vector_store %arg9[%c0_41, %c0_42], %49 {strides = array<i32>} : memref<32x1xf32, #tpu.memory_space<vmem>>, vector<32x1xf32>,
    } else {
    }
    %c0 = arith.constant 0 : index
    %c0_1 = arith.constant 0 : index
    %3 = vector.load %arg3[%c0, %c0_1] : memref<32x4xf32, #tpu.memory_space<vmem>>, vector<32x4xf32>
    %cst = arith.constant 0.000000e+00 : f32
    %4 = vector.broadcast %cst : f32 to vector<32x1xf32>
    %cst_2 = arith.constant 0.000000e+00 : f32
    %5 = vector.broadcast %cst_2 : f32 to vector<32x1xf32>
    %c0_3 = arith.constant 0 : index
    %c0_4 = arith.constant 0 : index
    %c0_5 = arith.constant 0 : index
    %6 = vector.load %arg2[%c0_3, %c0_4, %c0_5] : memref<2x4x16xf32, #tpu.memory_space<vmem>>, vector<1x4x16xf32>
    %7 = vector.shape_cast %6 : vector<1x4x16xf32> to vector<4x16xf32>
    %cst_6 = arith.constant dense<0.000000e+00> : vector<32x16xf32>
    %8 = tpu.matmul %3, %7, %cst_6 {dimension_numbers = #tpu.dot_dimension_numbers<[1], [0], [0], [1], [0, 0, 1, 1], [], []>} : vector<32x4xf32>, vector<4x16xf32>, vector<32x16xf32> -> vector<32x16xf32>
    %cst_7 = arith.constant dense<0.000000e+00> : vector<32xf32>
    %9 = vector.multi_reduction <add>, %8, %cst_7 [1] : vector<32x16xf32> to vector<32xf32>
    %10 = vector.shape_cast %9 : vector<32xf32> to vector<32x1xf32>
    %11 = arith.addf %4, %10 : vector<32x1xf32>
    %12 = arith.mulf %8, %8 : vector<32x16xf32>
    %cst_8 = arith.constant dense<0.000000e+00> : vector<32xf32>
    %13 = vector.multi_reduction <add>, %12, %cst_8 [1] : vector<32x16xf32> to vector<32xf32>
    %14 = vector.shape_cast %13 : vector<32xf32> to vector<32x1xf32>
    %15 = arith.addf %5, %14 : vector<32x1xf32>
    %cst_9 = arith.constant dense<0xFF800000> : vector<32xf32>
    %16 = vector.multi_reduction <maximumf>, %8, %cst_9 [1] : vector<32x16xf32> to vector<32xf32>
    %17 = vector.shape_cast %16 : vector<32xf32> to vector<32x1xf32>
    %c0_10 = arith.constant 0 : index
    %c0_11 = arith.constant 0 : index
    %18 = vector.load %arg7[%c0_10, %c0_11] : memref<32x2xf32, #tpu.memory_space<vmem>>, vector<32x1xf32>
    %19 = arith.maximumf %18, %17 : vector<32x1xf32>
    %c0_12 = arith.constant 0 : index
    %c0_13 = arith.constant 0 : index
    %20 = vector.load %arg7[%c0_12, %c0_13] : memref<32x2xf32, #tpu.memory_space<vmem>>, vector<32x1xf32>
    tpu.vector_store %arg7[%c0_12, %c0_13], %19 {strides = array<i32>} : memref<32x2xf32, #tpu.memory_space<vmem>>, vector<32x1xf32>,
    %c1 = arith.constant 1 : index
    %c0_14 = arith.constant 0 : index
    %c0_15 = arith.constant 0 : index
    %21 = vector.load %arg2[%c1, %c0_14, %c0_15] : memref<2x4x16xf32, #tpu.memory_space<vmem>>, vector<1x4x16xf32>
    %22 = vector.shape_cast %21 : vector<1x4x16xf32> to vector<4x16xf32>
    %cst_16 = arith.constant dense<0.000000e+00> : vector<32x16xf32>
    %23 = tpu.matmul %3, %22, %cst_16 {dimension_numbers = #tpu.dot_dimension_numbers<[1], [0], [0], [1], [0, 0, 1, 1], [], []>} : vector<32x4xf32>, vector<4x16xf32>, vector<32x16xf32> -> vector<32x16xf32>
    %cst_17 = arith.constant dense<0.000000e+00> : vector<32xf32>
    %24 = vector.multi_reduction <add>, %23, %cst_17 [1] : vector<32x16xf32> to vector<32xf32>
    %25 = vector.shape_cast %24 : vector<32xf32> to vector<32x1xf32>
    %26 = arith.addf %11, %25 : vector<32x1xf32>
    %27 = arith.mulf %23, %23 : vector<32x16xf32>
    %cst_18 = arith.constant dense<0.000000e+00> : vector<32xf32>
    %28 = vector.multi_reduction <add>, %27, %cst_18 [1] : vector<32x16xf32> to vector<32xf32>
    %29 = vector.shape_cast %28 : vector<32xf32> to vector<32x1xf32>
    %30 = arith.addf %15, %29 : vector<32x1xf32>
    %cst_19 = arith.constant dense<0xFF800000> : vector<32xf32>
    %31 = vector.multi_reduction <maximumf>, %23, %cst_19 [1] : vector<32x16xf32> to vector<32xf32>
    %32 = vector.shape_cast %31 : vector<32xf32> to vector<32x1xf32>
    %c0_20 = arith.constant 0 : index
    %c1_21 = arith.constant 1 : index
    %33 = vector.load %arg7[%c0_20, %c1_21] : memref<32x2xf32, #tpu.memory_space<vmem>>, vector<32x1xf32>
    %34 = arith.maximumf %33, %32 : vector<32x1xf32>
    %c0_22 = arith.constant 0 : index
    %c1_23 = arith.constant 1 : index
    %35 = vector.load %arg7[%c0_22, %c1_23] : memref<32x2xf32, #tpu.memory_space<vmem>>, vector<32x1xf32>
    tpu.vector_store %arg7[%c0_22, %c1_23], %34 {strides = array<i32>} : memref<32x2xf32, #tpu.memory_space<vmem>>, vector<32x1xf32>,
    %c0_24 = arith.constant 0 : index
    %c0_25 = arith.constant 0 : index
    %36 = vector.load %arg8[%c0_24, %c0_25] : memref<32x1xf32, #tpu.memory_space<vmem>>, vector<32x1xf32>
    %37 = arith.addf %36, %26 : vector<32x1xf32>
    %c0_26 = arith.constant 0 : index
    %c0_27 = arith.constant 0 : index
    %38 = vector.load %arg8[%c0_26, %c0_27] : memref<32x1xf32, #tpu.memory_space<vmem>>, vector<32x1xf32>
    tpu.vector_store %arg8[%c0_26, %c0_27], %37 {strides = array<i32>} : memref<32x1xf32, #tpu.memory_space<vmem>>, vector<32x1xf32>,
    %c0_28 = arith.constant 0 : index
    %c0_29 = arith.constant 0 : index
    %39 = vector.load %arg9[%c0_28, %c0_29] : memref<32x1xf32, #tpu.memory_space<vmem>>, vector<32x1xf32>
    %40 = arith.addf %39, %30 : vector<32x1xf32>
    %c0_30 = arith.constant 0 : index
    %c0_31 = arith.constant 0 : index
    %41 = vector.load %arg9[%c0_30, %c0_31] : memref<32x1xf32, #tpu.memory_space<vmem>>, vector<32x1xf32>
    tpu.vector_store %arg9[%c0_30, %c0_31], %40 {strides = array<i32>} : memref<32x1xf32, #tpu.memory_space<vmem>>, vector<32x1xf32>,
    %c0_i32_32 = arith.constant 0 : i32
    %42 = arith.cmpi eq, %arg1, %c0_i32_32 : i32
    %43 = arith.extui %42 : i1 to i32
    %c0_i32_33 = arith.constant 0 : i32
    %44 = arith.cmpi ne, %43, %c0_i32_33 : i32
    scf.if %44 {
      %c0_34 = arith.constant 0 : index
      %c0_35 = arith.constant 0 : index
      %45 = vector.load %arg7[%c0_34, %c0_35] : memref<32x2xf32, #tpu.memory_space<vmem>>, vector<32x2xf32>
      %c0_36 = arith.constant 0 : index
      %c0_37 = arith.constant 0 : index
      %c0_38 = arith.constant 0 : index
      %46 = vector.load %arg4[%c0_36, %c0_37, %c0_38] : memref<1x32x2xf32, #tpu.memory_space<vmem>>, vector<1x32x2xf32>
      %47 = vector.shape_cast %46 : vector<1x32x2xf32> to vector<32x2xf32>
      %48 = vector.shape_cast %45 : vector<32x2xf32> to vector<1x32x2xf32>
      tpu.vector_store %arg4[%c0_36, %c0_37, %c0_38], %48 {strides = array<i32>} : memref<1x32x2xf32, #tpu.memory_space<vmem>>, vector<1x32x2xf32>,
      %c0_39 = arith.constant 0 : index
      %c0_40 = arith.constant 0 : index
      %49 = vector.load %arg8[%c0_39, %c0_40] : memref<32x1xf32, #tpu.memory_space<vmem>>, vector<32x1xf32>
      %c0_41 = arith.constant 0 : index
      %c0_42 = arith.constant 0 : index
      %c0_43 = arith.constant 0 : index
      %50 = vector.load %arg5[%c0_41, %c0_42, %c0_43] : memref<1x32x1xf32, #tpu.memory_space<vmem>>, vector<1x32x1xf32>
      %51 = vector.shape_cast %50 : vector<1x32x1xf32> to vector<32x1xf32>
      %52 = vector.shape_cast %49 : vector<32x1xf32> to vector<1x32x1xf32>
      tpu.vector_store %arg5[%c0_41, %c0_42, %c0_43], %52 {strides = array<i32>} : memref<1x32x1xf32, #tpu.memory_space<vmem>>, vector<1x32x1xf32>,
      %c0_44 = arith.constant 0 : index
      %c0_45 = arith.constant 0 : index
      %53 = vector.load %arg9[%c0_44, %c0_45] : memref<32x1xf32, #tpu.memory_space<vmem>>, vector<32x1xf32>
      %c0_46 = arith.constant 0 : index
      %c0_47 = arith.constant 0 : index
      %c0_48 = arith.constant 0 : index
      %54 = vector.load %arg6[%c0_46, %c0_47, %c0_48] : memref<1x32x1xf32, #tpu.memory_space<vmem>>, vector<1x32x1xf32>
      %55 = vector.shape_cast %54 : vector<1x32x1xf32> to vector<32x1xf32>
      %56 = vector.shape_cast %53 : vector<32x1xf32> to vector<1x32x1xf32>
      tpu.vector_store %arg6[%c0_46, %c0_47, %c0_48], %56 {strides = array<i32>} : memref<1x32x1xf32, #tpu.memory_space<vmem>>, vector<1x32x1xf32>,
    } else {
    }
    return
  }
  func.func @transform_0(%arg0: i32, %arg1: i32) -> (i32, i32, i32) {
    %c0_i32 = arith.constant 0 : i32
    %c0_i32_0 = arith.constant 0 : i32
    return %arg0, %c0_i32, %arg1 : i32, i32, i32
  }
  func.func @transform_1(%arg0: i32, %arg1: i32) -> (i32, i32) {
    %c0_i32 = arith.constant 0 : i32
    %c0_i32_0 = arith.constant 0 : i32
    %c0_i32_1 = arith.constant 0 : i32
    return %c0_i32, %c0_i32_0 : i32, i32
  }
  func.func @transform_2(%arg0: i32, %arg1: i32) -> (i32, i32, i32) {
    %c0_i32 = arith.constant 0 : i32
    %c0_i32_0 = arith.constant 0 : i32
    %c0_i32_1 = arith.constant 0 : i32
    return %arg0, %c0_i32, %c0_i32_0 : i32, i32, i32
  }
  func.func @transform_3(%arg0: i32, %arg1: i32) -> (i32, i32, i32) {
    %c0_i32 = arith.constant 0 : i32
    %c0_i32_0 = arith.constant 0 : i32
    %c0_i32_1 = arith.constant 0 : i32
    return %arg0, %c0_i32, %c0_i32_0 : i32, i32, i32
  }
  func.func @transform_4(%arg0: i32, %arg1: i32) -> (i32, i32, i32) {
    %c0_i32 = arith.constant 0 : i32
    %c0_i32_0 = arith.constant 0 : i32
    %c0_i32_1 = arith.constant 0 : i32
    return %arg0, %c0_i32, %c0_i32_0 : i32, i32, i32
  }
}

</mosaic_0001>

<llo_original>
// kernel: tpu_custom_call.1
$region0: #{tpu_custom_call.1}
  #allocation0 [shape = 'u32[]', space=smem, size = 0x4, offset = 0x4, fixed_abs, tag = 'smem constant byte address 0x4 - core index']
  #allocation1 [shape = 'u32[144,128]{1,0:T(1,128)}', space=vmem, size = 0x12000, scoped, tag = 'internal scratch']
  #allocation2 [shape = 'f32[32,2]{1,0:T(8,128)}', space=vmem, size = 0x4000, scoped, tag = 'scratch operand']
  #allocation3 [shape = 'f32[32,1]{1,0:T(8,128)}', space=vmem, size = 0x4000, scoped, tag = 'scratch operand']
  #allocation4 [shape = 'f32[32,1]{1,0:T(8,128)}', space=vmem, size = 0x4000, scoped, tag = 'scratch operand']
  %s0 = inlined_call_operand.vmem [shape: f32[2,4,16], index: 0, kind: input, shape index: {}]
  %s1 = inlined_call_operand.vmem [shape: f32[32,4], index: 1, kind: input, shape index: {}]
  %s2 = inlined_call_operand.vmem [shape: f32[1,32,2], index: 2, kind: output, shape index: {0}]
  %s3 = inlined_call_operand.vmem [shape: f32[1,32,1], index: 3, kind: output, shape index: {1}]
  %s4 = inlined_call_operand.vmem [shape: f32[1,32,1], index: 4, kind: output, shape index: {2}]
  %5 = xla_tuple %s2, %s3, %s4
  %s6 = sld [smem:[#allocation0]]
  $region42: #{tpu_custom_call.1} parent=0
    _
  %s8 = ssub.s32 1, %s6
  %s9 = scalar_select 0, %s8, %s6
  // Predicated region
  $region2: #{tpu_custom_call.1} parent=0 // pred_check
    _
  $region3: #{tpu_custom_call.1} parent=0 // pred_check_branch
    %11 = sbr.rel (0) target = $region5
  $region4: #{tpu_custom_call.1} parent=0 // pred_region
    _
  $region5: #{tpu_custom_call.1} parent=0 // pred_fallthru
    _
  // Predicated region
  $region6: #{tpu_custom_call.1} parent=0 // pred_check
    _
  $region7: #{tpu_custom_call.1} parent=0 // pred_check_branch
    %13 = sbr.rel (0) target = $region9
  $region8: #{tpu_custom_call.1} parent=0 // pred_region
    _
  $region9: #{tpu_custom_call.1} parent=0 // pred_fallthru
    _
  %p14 = scmp.eq.s32.totalorder 0, 0
  // Predicated region
  $region10: #{tpu_custom_call.1} parent=0 // pred_check
    %p15 = pneg %p14
  $region11: #{tpu_custom_call.1} parent=0 // pred_check_branch
    %17 = sbr.rel (%p15) target = $region13
  $region12: #{tpu_custom_call.1} parent=0 // pred_region
    %vm18 = vcmask 15360
    %19 = vst.msk [vmem:[#allocation2] sm:$0xff] %vm18, -inf
    %20 = vst.msk [vmem:[#allocation2 + $0x8] sm:$0xff] %vm18, -inf
    %21 = vst.msk [vmem:[#allocation2 + $0x10] sm:$0xff] %vm18, -inf
    %22 = vst.msk [vmem:[#allocation2 + $0x18] sm:$0xff] %vm18, -inf
    %vm23 = vcmask 7168
    %24 = vst.msk [vmem:[#allocation3] sm:$0xff] %vm23, 0.0
    %25 = vst.msk [vmem:[#allocation3 + $0x8] sm:$0xff] %vm23, 0.0
    %26 = vst.msk [vmem:[#allocation3 + $0x10] sm:$0xff] %vm23, 0.0
    %27 = vst.msk [vmem:[#allocation3 + $0x18] sm:$0xff] %vm23, 0.0
    %28 = vst.msk [vmem:[#allocation4] sm:$0xff] %vm23, 0.0
    %29 = vst.msk [vmem:[#allocation4 + $0x8] sm:$0xff] %vm23, 0.0
    %30 = vst.msk [vmem:[#allocation4 + $0x10] sm:$0xff] %vm23, 0.0
    %31 = vst.msk [vmem:[#allocation4 + $0x18] sm:$0xff] %vm23, 0.0
  $region13: #{tpu_custom_call.1} parent=0 // pred_fallthru
    _
  %v32 = vld [vmem:[%s1] sm:$0xff]
  %v33 = vld [vmem:[%s1 + $0x8] sm:$0xff]
  %v34 = vld [vmem:[%s1 + $0x10] sm:$0xff]
  %v35 = vld [vmem:[%s1 + $0x18] sm:$0xff]
  %v36 = vld [vmem:[%s0] sm:$0xf]
  %vm37 = vcmask 31744
  %v39 = vsel %vm37, %v32, 0
  %v42 = vsel %vm37, %v33, 0
  %v45 = vsel %vm37, %v34, 0
  %v48 = vsel %vm37, %v35, 0
  %vm50 = vcmask 1043456
  %v52 = vsel %vm50, %v36, 0
  %54 = vmatprep.subr.mxu0 0.0
  %55 = vmatpush1.msra.mxu0 0.0
  %56 = vmatprep.subr.mxu0 0.0
  %57 = vmatpush1.msra.mxu0 0.0
  %58 = vmatprep.subr.mxu0 0.0
  %59 = vmatpush1.msra.mxu0 0.0
  %60 = vmatprep.subr.mxu0 0.0
  %61 = vmatpush1.msra.mxu0 0.0
  %62 = vmatprep.subr.mxu0 0.0
  %63 = vmatpush1.msra.mxu0 0.0
  %64 = vmatprep.subr.mxu0 0.0
  %65 = vmatpush1.msra.mxu0 0.0
  %66 = vmatprep.subr.mxu0 0.0
  %67 = vmatpush1.msra.mxu0 0.0
  %68 = vmatprep.subr.mxu0 0.0
  %69 = vmatpush1.msra.mxu0 0.0
  %70 = vmatprep.subr.mxu0 0.0
  %71 = vmatpush1.msra.mxu0 0.0
  %72 = vmatprep.subr.mxu0 0.0
  %73 = vmatpush1.msra.mxu0 0.0
  %74 = vmatprep.subr.mxu0 0.0
  %75 = vmatpush1.msra.mxu0 0.0
  %76 = vmatprep.subr.mxu0 0.0
  %77 = vmatpush1.msra.mxu0 0.0
  %78 = vmatprep.subr.mxu0 0.0
  %79 = vmatpush1.msra.mxu0 0.0
  %80 = vmatprep.subr.mxu0 0.0
  %81 = vmatpush1.msra.mxu0 0.0
  %82 = vmatprep.subr.mxu0 0.0
  %83 = vmatpush1.msra.mxu0 0.0
  %84 = vmatprep.subr.mxu0 0.0
  %85 = vmatpush1.msra.mxu0 %v52
  %86 = vmatprep.subr.mxu0 0.0
  %87 = vmatpush2.msra.mxu0 0.0
  %88 = vmatprep.subr.mxu0 0.0
  %89 = vmatpush2.msra.mxu0 0.0
  %90 = vmatprep.subr.mxu0 0.0
  %91 = vmatpush2.msra.mxu0 0.0
  %92 = vmatprep.subr.mxu0 0.0
  %93 = vmatpush2.msra.mxu0 0.0
  %94 = vmatprep.subr.mxu0 0.0
  %95 = vmatpush2.msra.mxu0 0.0
  %96 = vmatprep.subr.mxu0 0.0
  %97 = vmatpush2.msra.mxu0 0.0
  %98 = vmatprep.subr.mxu0 0.0
  %99 = vmatpush2.msra.mxu0 0.0
  %100 = vmatprep.subr.mxu0 0.0
  %101 = vmatpush2.msra.mxu0 0.0
  %102 = vmatprep.subr.mxu0 0.0
  %103 = vmatpush2.msra.mxu0 0.0
  %104 = vmatprep.subr.mxu0 0.0
  %105 = vmatpush2.msra.mxu0 0.0
  %106 = vmatprep.subr.mxu0 0.0
  %107 = vmatpush2.msra.mxu0 0.0
  %108 = vmatprep.subr.mxu0 0.0
  %109 = vmatpush2.msra.mxu0 0.0
  %110 = vmatprep.subr.mxu0 0.0
  %111 = vmatpush2.msra.mxu0 0.0
  %112 = vmatprep.subr.mxu0 0.0
  %113 = vmatpush2.msra.mxu0 0.0
  %114 = vmatprep.subr.mxu0 0.0
  %115 = vmatpush2.msra.mxu0 0.0
  %116 = vmatprep.subr.mxu0 0.0
  %117 = vmatpush2.msra.mxu0 0.0
  %118 = vmatprep.mubr.f32.mxu0 0.0
  %119 = vmatmul.mubr.f32.gmra.mxu0 %v39
  %v120 = vpop.f32.mrf.mxu0
  %v121 = vadd.f32 0.0, %v120
  %v122 = vpop.f32.mrf.mxu0
  %123 = vmatprep.mubr.f32.mxu0 0.0
  %124 = vmatmul.mubr.f32.gmra.mxu0 %v42
  %v125 = vpop.f32.mrf.mxu0
  %v126 = vadd.f32 0.0, %v125
  %v127 = vpop.f32.mrf.mxu0
  %128 = vmatprep.mubr.f32.mxu0 0.0
  %129 = vmatmul.mubr.f32.gmra.mxu0 %v45
  %v130 = vpop.f32.mrf.mxu0
  %v131 = vadd.f32 0.0, %v130
  %v132 = vpop.f32.mrf.mxu0
  %133 = vmatprep.mubr.f32.mxu0 0.0
  %134 = vmatmul.mubr.f32.gmra.mxu0 %v48
  %v135 = vpop.f32.mrf.mxu0
  %v136 = vadd.f32 0.0, %v135
  %v137 = vpop.f32.mrf.mxu0
  %138 = vdwg.mxu0
  %vm139 = vcmask 130048
  %v140 = vsel %vm139, %v121, 0.0
  %141 = vadd.xlane.f32.xlu0 %v140
  %v142 = vpop.xlane.xlu0 %141
  %v143 = vsel %vm139, %v126, 0.0
  %144 = vadd.xlane.f32.xlu0 %v143
  %v145 = vpop.xlane.xlu0 %144
  %v146 = vsel %vm139, %v131, 0.0
  %147 = vadd.xlane.f32.xlu0 %v146
  %v148 = vpop.xlane.xlu0 %147
  %v149 = vsel %vm139, %v136, 0.0
  %150 = vadd.xlane.f32.xlu0 %v149
  %v151 = vpop.xlane.xlu0 %150
  %v152 = vadd.f32 %v142, 0.0
  %v153 = vadd.f32 %v145, 0.0
  %v154 = vadd.f32 %v148, 0.0
  %v155 = vadd.f32 %v151, 0.0
  %v156 = vmul.f32 %v121, %v121
  %v157 = vmul.f32 %v126, %v126
  %v158 = vmul.f32 %v131, %v131
  %v159 = vmul.f32 %v136, %v136
  %v160 = vsel %vm139, %v156, 0.0
  %161 = vadd.xlane.f32.xlu0 %v160
  %v162 = vpop.xlane.xlu0 %161
  %v163 = vsel %vm139, %v157, 0.0
  %164 = vadd.xlane.f32.xlu0 %v163
  %v165 = vpop.xlane.xlu0 %164
  %v166 = vsel %vm139, %v158, 0.0
  %167 = vadd.xlane.f32.xlu0 %v166
  %v168 = vpop.xlane.xlu0 %167
  %v169 = vsel %vm139, %v159, 0.0
  %170 = vadd.xlane.f32.xlu0 %v169
  %v171 = vpop.xlane.xlu0 %170
  %v172 = vadd.f32 %v162, 0.0
  %v173 = vadd.f32 %v165, 0.0
  %v174 = vadd.f32 %v168, 0.0
  %v175 = vadd.f32 %v171, 0.0
  %v176 = vsel %vm139, %v121, -inf
  %177 = vmax.xlane.f32.xlu0 %v176
  %v178 = vpop.xlane.xlu0 %177
  %v179 = vsel %vm139, %v126, -inf
  %180 = vmax.xlane.f32.xlu0 %v179
  %v181 = vpop.xlane.xlu0 %180
  %v182 = vsel %vm139, %v131, -inf
  %183 = vmax.xlane.f32.xlu0 %v182
  %v184 = vpop.xlane.xlu0 %183
  %v185 = vsel %vm139, %v136, -inf
  %186 = vmax.xlane.f32.xlu0 %v185
  %v187 = vpop.xlane.xlu0 %186
  %v188 = vld [vmem:[#allocation2] sm:$0xff]
  %v189 = vld [vmem:[#allocation2 + $0x8] sm:$0xff]
  %v190 = vld [vmem:[#allocation2 + $0x10] sm:$0xff]
  %v191 = vld [vmem:[#allocation2 + $0x18] sm:$0xff]
  %v192 = vmax.f32 %v188, %v178
  %v193 = vmax.f32 %v189, %v181
  %v194 = vmax.f32 %v190, %v184
  %v195 = vmax.f32 %v191, %v187
  %vm196 = vcmask 7168
  %197 = vst.msk [vmem:[#allocation2] sm:$0xff] %vm196, %v192
  %198 = vst.msk [vmem:[#allocation2 + $0x8] sm:$0xff] %vm196, %v193
  %199 = vst.msk [vmem:[#allocation2 + $0x10] sm:$0xff] %vm196, %v194
  %200 = vst.msk [vmem:[#allocation2 + $0x18] sm:$0xff] %vm196, %v195
  %s201 = scalar_lea.vmem %s0, 4
  %v202 = vld [vmem:[%s201] sm:$0xf]
  %v204 = vsel %vm50, %v202, 0
  %206 = vmatprep.subr.mxu0 0.0
  %207 = vmatpush1.msra.mxu0 0.0
  %208 = vmatprep.subr.mxu0 0.0
  %209 = vmatpush1.msra.mxu0 0.0
  %210 = vmatprep.subr.mxu0 0.0
  %211 = vmatpush1.msra.mxu0 0.0
  %212 = vmatprep.subr.mxu0 0.0
  %213 = vmatpush1.msra.mxu0 0.0
  %214 = vmatprep.subr.mxu0 0.0
  %215 = vmatpush1.msra.mxu0 0.0
  %216 = vmatprep.subr.mxu0 0.0
  %217 = vmatpush1.msra.mxu0 0.0
  %218 = vmatprep.subr.mxu0 0.0
  %219 = vmatpush1.msra.mxu0 0.0
  %220 = vmatprep.subr.mxu0 0.0
  %221 = vmatpush1.msra.mxu0 0.0
  %222 = vmatprep.subr.mxu0 0.0
  %223 = vmatpush1.msra.mxu0 0.0
  %224 = vmatprep.subr.mxu0 0.0
  %225 = vmatpush1.msra.mxu0 0.0
  %226 = vmatprep.subr.mxu0 0.0
  %227 = vmatpush1.msra.mxu0 0.0
  %228 = vmatprep.subr.mxu0 0.0
  %229 = vmatpush1.msra.mxu0 0.0
  %230 = vmatprep.subr.mxu0 0.0
  %231 = vmatpush1.msra.mxu0 0.0
  %232 = vmatprep.subr.mxu0 0.0
  %233 = vmatpush1.msra.mxu0 0.0
  %234 = vmatprep.subr.mxu0 0.0
  %235 = vmatpush1.msra.mxu0 0.0
  %236 = vmatprep.subr.mxu0 0.0
  %237 = vmatpush1.msra.mxu0 %v204
  %238 = vmatprep.subr.mxu0 0.0
  %239 = vmatpush2.msra.mxu0 0.0
  %240 = vmatprep.subr.mxu0 0.0
  %241 = vmatpush2.msra.mxu0 0.0
  %242 = vmatprep.subr.mxu0 0.0
  %243 = vmatpush2.msra.mxu0 0.0
  %244 = vmatprep.subr.mxu0 0.0
  %245 = vmatpush2.msra.mxu0 0.0
  %246 = vmatprep.subr.mxu0 0.0
  %247 = vmatpush2.msra.mxu0 0.0
  %248 = vmatprep.subr.mxu0 0.0
  %249 = vmatpush2.msra.mxu0 0.0
  %250 = vmatprep.subr.mxu0 0.0
  %251 = vmatpush2.msra.mxu0 0.0
  %252 = vmatprep.subr.mxu0 0.0
  %253 = vmatpush2.msra.mxu0 0.0
  %254 = vmatprep.subr.mxu0 0.0
  %255 = vmatpush2.msra.mxu0 0.0
  %256 = vmatprep.subr.mxu0 0.0
  %257 = vmatpush2.msra.mxu0 0.0
  %258 = vmatprep.subr.mxu0 0.0
  %259 = vmatpush2.msra.mxu0 0.0
  %260 = vmatprep.subr.mxu0 0.0
  %261 = vmatpush2.msra.mxu0 0.0
  %262 = vmatprep.subr.mxu0 0.0
  %263 = vmatpush2.msra.mxu0 0.0
  %264 = vmatprep.subr.mxu0 0.0
  %265 = vmatpush2.msra.mxu0 0.0
  %266 = vmatprep.subr.mxu0 0.0
  %267 = vmatpush2.msra.mxu0 0.0
  %268 = vmatprep.subr.mxu0 0.0
  %269 = vmatpush2.msra.mxu0 0.0
  %270 = vmatprep.mubr.f32.mxu0 0.0
  %271 = vmatmul.mubr.f32.gmra.mxu0 %v39
  %v272 = vpop.f32.mrf.mxu0
  %v273 = vadd.f32 0.0, %v272
  %v274 = vpop.f32.mrf.mxu0
  %275 = vmatprep.mubr.f32.mxu0 0.0
  %276 = vmatmul.mubr.f32.gmra.mxu0 %v42
  %v277 = vpop.f32.mrf.mxu0
  %v278 = vadd.f32 0.0, %v277
  %v279 = vpop.f32.mrf.mxu0
  %280 = vmatprep.mubr.f32.mxu0 0.0
  %281 = vmatmul.mubr.f32.gmra.mxu0 %v45
  %v282 = vpop.f32.mrf.mxu0
  %v283 = vadd.f32 0.0, %v282
  %v284 = vpop.f32.mrf.mxu0
  %285 = vmatprep.mubr.f32.mxu0 0.0
  %286 = vmatmul.mubr.f32.gmra.mxu0 %v48
  %v287 = vpop.f32.mrf.mxu0
  %v288 = vadd.f32 0.0, %v287
  %v289 = vpop.f32.mrf.mxu0
  %290 = vdwg.mxu0
  %v291 = vsel %vm139, %v273, 0.0
  %292 = vadd.xlane.f32.xlu0 %v291
  %v293 = vpop.xlane.xlu0 %292
  %v294 = vsel %vm139, %v278, 0.0
  %295 = vadd.xlane.f32.xlu0 %v294
  %v296 = vpop.xlane.xlu0 %295
  %v297 = vsel %vm139, %v283, 0.0
  %298 = vadd.xlane.f32.xlu0 %v297
  %v299 = vpop.xlane.xlu0 %298
  %v300 = vsel %vm139, %v288, 0.0
  %301 = vadd.xlane.f32.xlu0 %v300
  %v302 = vpop.xlane.xlu0 %301
  %v303 = vadd.f32 %v152, %v293
  %v304 = vadd.f32 %v153, %v296
  %v305 = vadd.f32 %v154, %v299
  %v306 = vadd.f32 %v155, %v302
  %v307 = vmul.f32 %v273, %v273
  %v308 = vmul.f32 %v278, %v278
  %v309 = vmul.f32 %v283, %v283
  %v310 = vmul.f32 %v288, %v288
  %v311 = vsel %vm139, %v307, 0.0
  %312 = vadd.xlane.f32.xlu0 %v311
  %v313 = vpop.xlane.xlu0 %312
  %v314 = vsel %vm139, %v308, 0.0
  %315 = vadd.xlane.f32.xlu0 %v314
  %v316 = vpop.xlane.xlu0 %315
  %v317 = vsel %vm139, %v309, 0.0
  %318 = vadd.xlane.f32.xlu0 %v317
  %v319 = vpop.xlane.xlu0 %318
  %v320 = vsel %vm139, %v310, 0.0
  %321 = vadd.xlane.f32.xlu0 %v320
  %v322 = vpop.xlane.xlu0 %321
  %v323 = vadd.f32 %v172, %v313
  %v324 = vadd.f32 %v173, %v316
  %v325 = vadd.f32 %v174, %v319
  %v326 = vadd.f32 %v175, %v322
  %v327 = vsel %vm139, %v273, -inf
  %328 = vmax.xlane.f32.xlu0 %v327
  %v329 = vpop.xlane.xlu0 %328
  %v330 = vsel %vm139, %v278, -inf
  %331 = vmax.xlane.f32.xlu0 %v330
  %v332 = vpop.xlane.xlu0 %331
  %v333 = vsel %vm139, %v283, -inf
  %334 = vmax.xlane.f32.xlu0 %v333
  %v335 = vpop.xlane.xlu0 %334
  %v336 = vsel %vm139, %v288, -inf
  %337 = vmax.xlane.f32.xlu0 %v336
  %v338 = vpop.xlane.xlu0 %337
  %v339 = vld [vmem:[#allocation2] sm:$0xff]
  %v340 = vld [vmem:[#allocation2 + $0x8] sm:$0xff]
  %v341 = vld [vmem:[#allocation2 + $0x10] sm:$0xff]
  %v342 = vld [vmem:[#allocation2 + $0x18] sm:$0xff]
  %v343 = vmax.f32 %v339, %v329
  %v344 = vmax.f32 %v340, %v332
  %v345 = vmax.f32 %v341, %v335
  %v346 = vmax.f32 %v342, %v338
  %vm347 = vcmask 15368
  %348 = vst.msk [vmem:[#allocation2] sm:$0xff] %vm347, %v343
  %349 = vst.msk [vmem:[#allocation2 + $0x8] sm:$0xff] %vm347, %v344
  %350 = vst.msk [vmem:[#allocation2 + $0x10] sm:$0xff] %vm347, %v345
  %351 = vst.msk [vmem:[#allocation2 + $0x18] sm:$0xff] %vm347, %v346
  %v352 = vld [vmem:[#allocation3] sm:$0xff]
  %v353 = vld [vmem:[#allocation3 + $0x8] sm:$0xff]
  %v354 = vld [vmem:[#allocation3 + $0x10] sm:$0xff]
  %v355 = vld [vmem:[#allocation3 + $0x18] sm:$0xff]
  %v356 = vadd.f32 %v352, %v303
  %v357 = vadd.f32 %v353, %v304
  %v358 = vadd.f32 %v354, %v305
  %v359 = vadd.f32 %v355, %v306
  %360 = vst.msk [vmem:[#allocation3] sm:$0xff] %vm196, %v356
  %361 = vst.msk [vmem:[#allocation3 + $0x8] sm:$0xff] %vm196, %v357
  %362 = vst.msk [vmem:[#allocation3 + $0x10] sm:$0xff] %vm196, %v358
  %363 = vst.msk [vmem:[#allocation3 + $0x18] sm:$0xff] %vm196, %v359
  %v364 = vld [vmem:[#allocation4] sm:$0xff]
  %v365 = vld [vmem:[#allocation4 + $0x8] sm:$0xff]
  %v366 = vld [vmem:[#allocation4 + $0x10] sm:$0xff]
  %v367 = vld [vmem:[#allocation4 + $0x18] sm:$0xff]
  %v368 = vadd.f32 %v364, %v323
  %v369 = vadd.f32 %v365, %v324
  %v370 = vadd.f32 %v366, %v325
  %v371 = vadd.f32 %v367, %v326
  %372 = vst.msk [vmem:[#allocation4] sm:$0xff] %vm196, %v368
  %373 = vst.msk [vmem:[#allocation4 + $0x8] sm:$0xff] %vm196, %v369
  %374 = vst.msk [vmem:[#allocation4 + $0x10] sm:$0xff] %vm196, %v370
  %375 = vst.msk [vmem:[#allocation4 + $0x18] sm:$0xff] %vm196, %v371
  // Predicated region
  $region14: #{tpu_custom_call.1} parent=0 // pred_check
    %p376 = pneg %p14
  $region15: #{tpu_custom_call.1} parent=0 // pred_check_branch
    %378 = sbr.rel (%p376) target = $region17
  $region16: #{tpu_custom_call.1} parent=0 // pred_region
    %v379 = vld [vmem:[#allocation2] sm:$0xff]
    %v380 = vld [vmem:[#allocation2 + $0x8] sm:$0xff]
    %v381 = vld [vmem:[#allocation2 + $0x10] sm:$0xff]
    %v382 = vld [vmem:[#allocation2 + $0x18] sm:$0xff]
    %vm383 = vcmask 15360
    %384 = vst.msk [vmem:[%s2] sm:$0xff] %vm383, %v379
    %385 = vst.msk [vmem:[%s2 + $0x8] sm:$0xff] %vm383, %v380
    %386 = vst.msk [vmem:[%s2 + $0x10] sm:$0xff] %vm383, %v381
    %387 = vst.msk [vmem:[%s2 + $0x18] sm:$0xff] %vm383, %v382
    %v388 = vld [vmem:[#allocation3] sm:$0xff]
    %v389 = vld [vmem:[#allocation3 + $0x8] sm:$0xff]
    %v390 = vld [vmem:[#allocation3 + $0x10] sm:$0xff]
    %v391 = vld [vmem:[#allocation3 + $0x18] sm:$0xff]
    %392 = vst.msk [vmem:[%s3] sm:$0xff] %vm196, %v388
    %393 = vst.msk [vmem:[%s3 + $0x8] sm:$0xff] %vm196, %v389
    %394 = vst.msk [vmem:[%s3 + $0x10] sm:$0xff] %vm196, %v390
    %395 = vst.msk [vmem:[%s3 + $0x18] sm:$0xff] %vm196, %v391
    %v396 = vld [vmem:[#allocation4] sm:$0xff]
    %v397 = vld [vmem:[#allocation4 + $0x8] sm:$0xff]
    %v398 = vld [vmem:[#allocation4 + $0x10] sm:$0xff]
    %v399 = vld [vmem:[#allocation4 + $0x18] sm:$0xff]
    %400 = vst.msk [vmem:[%s4] sm:$0xff] %vm196, %v396
    %401 = vst.msk [vmem:[%s4 + $0x8] sm:$0xff] %vm196, %v397
    %402 = vst.msk [vmem:[%s4 + $0x10] sm:$0xff] %vm196, %v398
    %403 = vst.msk [vmem:[%s4 + $0x18] sm:$0xff] %vm196, %v399
  $region17: #{tpu_custom_call.1} parent=0 // pred_fallthru
    _
  // Predicated region
  $region18: #{tpu_custom_call.1} parent=0 // pred_check
    _
  $region19: #{tpu_custom_call.1} parent=0 // pred_check_branch
    %405 = sbr.rel (0) target = $region21
  $region20: #{tpu_custom_call.1} parent=0 // pred_region
    _
  $region21: #{tpu_custom_call.1} parent=0 // pred_fallthru
    _
  // Predicated region
  $region22: #{tpu_custom_call.1} parent=0 // pred_check
    _
  $region23: #{tpu_custom_call.1} parent=0 // pred_check_branch
    %407 = sbr.rel (0) target = $region25
  $region24: #{tpu_custom_call.1} parent=0 // pred_region
    _
  $region25: #{tpu_custom_call.1} parent=0 // pred_fallthru
    _
  // Predicated region
  $region26: #{tpu_custom_call.1} parent=0 // pred_check
    _
  $region27: #{tpu_custom_call.1} parent=0 // pred_check_branch
    %409 = sbr.rel (0) target = $region29
  $region28: #{tpu_custom_call.1} parent=0 // pred_region
    _
  $region29: #{tpu_custom_call.1} parent=0 // pred_fallthru
    _
  // Predicated region
  $region30: #{tpu_custom_call.1} parent=0 // pred_check
    _
  $region31: #{tpu_custom_call.1} parent=0 // pred_check_branch
    %411 = sbr.rel (0) target = $region33
  $region32: #{tpu_custom_call.1} parent=0 // pred_region
    _
  $region33: #{tpu_custom_call.1} parent=0 // pred_fallthru
    _
  // Predicated region
  $region34: #{tpu_custom_call.1} parent=0 // pred_check
    _
  $region35: #{tpu_custom_call.1} parent=0 // pred_check_branch
    %413 = sbr.rel (0) target = $region37
  $region36: #{tpu_custom_call.1} parent=0 // pred_region
    _
  $region37: #{tpu_custom_call.1} parent=0 // pred_fallthru
    _
  // Predicated region
  $region38: #{tpu_custom_call.1} parent=0 // pred_check
    _
  $region39: #{tpu_custom_call.1} parent=0 // pred_check_branch
    %415 = sbr.rel (0) target = $region41
  $region40: #{tpu_custom_call.1} parent=0 // pred_region
    _
  $region41: #{tpu_custom_call.1} parent=0 // pred_fallthru
    _

</llo_original>
